<compile_context>
chip_gen: v7x
topology: tpu7x:2x2x1
jax: 0.10.0
libtpu: 0.0.40
codegen_flags: <defaults>
</compile_context>

<pallas_src>
import jax
import jax.numpy as jnp
from jax.experimental import pallas as pl
from jax.experimental.pallas import tpu as pltpu

LANE = 128  # TPU vreg lane width: every feature dim is zero-padded to this.


# ----------------------------------------------------------------------------
# Pallas kernel: fused conv1 + ReLU + conv2
# ----------------------------------------------------------------------------
def _graphsage_fused_kernel(adj_ref, x_ref, w1_ref, b1_ref, w2_ref, b2_ref,
                            o_ref, z_ref):
    """Fused two-layer GraphSAGE forward.

    adj_ref : [N, N]         bf16  row-normalized adjacency (mean aggregation)
    x_ref   : [N, LANE]      bf16  node features, zero-padded to 128 lanes
    w1_ref  : [2*LANE, LANE] bf16  stacked [W_l1; W_r1], zero-padded
    b1_ref  : [1, LANE]      f32   padded bias 1
    w2_ref  : [2*LANE, LANE] bf16  stacked [W_l2; W_r2], zero-padded
    b2_ref  : [1, LANE]      f32   padded bias 2
    o_ref   : [N, LANE]      f32   padded output (lane-dense store)
    z_ref   : [N, 2*LANE]    bf16  scratch: [agg | feat] staging buffer
    """
    adj = adj_ref[...]
    x = x_ref[...]

    # ---- layer 1: h = relu([adj @ x | x] @ [W_l1; W_r1] + b1) ----
    agg1 = jnp.dot(adj, x, preferred_element_type=jnp.float32)
    z_ref[:, :LANE] = agg1.astype(jnp.bfloat16)
    z_ref[:, LANE:] = x
    h = jnp.dot(z_ref[...], w1_ref[...], preferred_element_type=jnp.float32)
    h = jnp.maximum(h + b1_ref[...], 0.0)
    h_bf = h.astype(jnp.bfloat16)

    # ---- layer 2: out = [adj @ h | h] @ [W_l2; W_r2] + b2 ----
    agg2 = jnp.dot(adj, h_bf, preferred_element_type=jnp.float32)
    z_ref[:, :LANE] = agg2.astype(jnp.bfloat16)
    z_ref[:, LANE:] = h_bf
    out = jnp.dot(z_ref[...], w2_ref[...], preferred_element_type=jnp.float32)
    o_ref[...] = (out + b2_ref[...]).astype(o_ref.dtype)


# ----------------------------------------------------------------------------
# Wrapper: pack/pad operands, single pallas_call, slice back
# ----------------------------------------------------------------------------
def _pack_stacked_weight(w_l, w_r):
    """[C_in, C_out] x2 -> zero-padded stacked [2*LANE, LANE] bf16."""
    c_in, c_out = w_l.shape
    w = jnp.zeros((2 * LANE, LANE), jnp.float32)
    w = w.at[:c_in, :c_out].set(w_l)
    w = w.at[LANE:LANE + c_in, :c_out].set(w_r)
    return w.astype(jnp.bfloat16)


def _pad_bias(b):
    c_out = b.shape[-1]
    return jnp.zeros((1, LANE), jnp.float32).at[:, :c_out].set(b.reshape(1, -1))


@jax.jit
def graphsage_forward(params, x, adj):
    n, c_in = x.shape
    c_out = params["conv2"]["w_l"].shape[1]

    # Pack once per call (tiny tensors; XLA fuses this into cheap pads/casts).
    x_p = jnp.zeros((n, LANE), jnp.float32).at[:, :c_in].set(x).astype(jnp.bfloat16)
    adj_b = adj.astype(jnp.bfloat16)
    w1 = _pack_stacked_weight(params["conv1"]["w_l"], params["conv1"]["w_r"])
    b1 = _pad_bias(params["conv1"]["b"])
    w2 = _pack_stacked_weight(params["conv2"]["w_l"], params["conv2"]["w_r"])
    b2 = _pad_bias(params["conv2"]["b"])

    vmem = pl.BlockSpec(memory_space=pltpu.MemorySpace.VMEM)
    out_p = pl.pallas_call(
        _graphsage_fused_kernel,
        out_shape=jax.ShapeDtypeStruct((n, LANE), jnp.float32),
        in_specs=[vmem] * 6,
        out_specs=vmem,
        scratch_shapes=[pltpu.VMEM((n, 2 * LANE), jnp.bfloat16)],
    )(adj_b, x_p, w1, b1, w2, b2)

    return out_p[:, :c_out]


# ----------------------------------------------------------------------------
# Glue: adjacency construction, params, f32 reference
# ----------------------------------------------------------------------------
def build_mean_adjacency(edge_index, num_nodes):
    """Dense row-normalized adjacency: A[i, j] = 1/deg_in(i) if edge j->i."""
    src = edge_index[0]
    dst = edge_index[1]
    a = jnp.zeros((num_nodes, num_nodes), jnp.float32).at[dst, src].add(1.0)
    deg = jnp.sum(a, axis=1, keepdims=True)
    # nodes with no in-neighbors aggregate to 0 (matches PyG mean aggregation)
    return jnp.where(deg > 0, a / jnp.maximum(deg, 1.0), 0.0)


def init_graphsage_params(key, in_channels, hidden_channels, out_channels):
    """Deterministic Glorot-uniform-ish init for the two SAGEConv layers."""
    def glorot(k, fan_in, fan_out):
        limit = jnp.sqrt(6.0 / (fan_in + fan_out))
        return jax.random.uniform(
            k, (fan_in, fan_out), jnp.float32, minval=-limit, maxval=limit
        )

    k1, k2, k3, k4 = jax.random.split(key, 4)
    return {
        "conv1": {
            "w_l": glorot(k1, in_channels, hidden_channels),
            "w_r": glorot(k2, in_channels, hidden_channels),
            "b": jnp.zeros((1, hidden_channels), jnp.float32),
        },
        "conv2": {
            "w_l": glorot(k3, hidden_channels, out_channels),
            "w_r": glorot(k4, hidden_channels, out_channels),
            "b": jnp.zeros((1, out_channels), jnp.float32),
        },
    }


def graphsage_reference(params, x, adj):
    """Pure-JAX f32 reference for validation."""
    def layer(feat, p):
        return (adj @ feat) @ p["w_l"] + feat @ p["w_r"] + p["b"]

    h = jax.nn.relu(layer(x, params["conv1"]))
    return layer(h, params["conv2"])


# ----------------------------------------------------------------------------
# Main
# ----------------------------------------------------------------------------
if __name__ == "__main__":
    key = jax.random.PRNGKey(0)
    k_x, k_e, k_p = jax.random.split(key, 3)

    num_nodes = 32
    in_channels = 8
    hidden_channels = 16
    out_channels = 8
    num_edges = 64

    # Synthetic node features and edge list.
    x = jax.random.normal(k_x, (num_nodes, in_channels), jnp.float32)
    edge_index = jax.random.randint(
        k_e, (2, num_edges), minval=0, maxval=num_nodes, dtype=jnp.int32
    )

    adj = build_mean_adjacency(edge_index, num_nodes)
    params = init_graphsage_params(k_p, in_channels, hidden_channels, out_channels)

    out = graphsage_forward(params, x, adj)
    out = jax.block_until_ready(out)
    ref = graphsage_reference(params, x, adj)

    assert out.shape == (num_nodes, out_channels)
    assert jnp.all(jnp.isfinite(out))
    # bf16 MXU inputs with f32 accumulation -> loose but meaningful tolerance.
    assert jnp.allclose(out, ref, rtol=5e-2, atol=1e-1), (
        f"max abs err {float(jnp.max(jnp.abs(out - ref)))}"
    )
    print("KERNEL_OK")
</pallas_src>

<mosaic_0001>
module attributes {stable_mosaic.version = 11 : i64} {
  func.func @_graphsage_fused_kernel(%arg0: memref<32x32xbf16, #tpu.memory_space<vmem>>, %arg1: memref<32x128xbf16, #tpu.memory_space<vmem>>, %arg2: memref<256x128xbf16, #tpu.memory_space<vmem>>, %arg3: memref<1x128xf32, #tpu.memory_space<vmem>>, %arg4: memref<256x128xbf16, #tpu.memory_space<vmem>>, %arg5: memref<1x128xf32, #tpu.memory_space<vmem>>, %arg6: memref<32x128xf32, #tpu.memory_space<vmem>>, %arg7: memref<32x256xbf16, #tpu.memory_space<vmem>>) attributes {dimension_semantics = [], scalar_prefetch = 0 : i64, scratch_operands = 1 : i64, tpu.core_type = #tpu.core_type<tc>} {
    %c0 = arith.constant 0 : index
    %c0_0 = arith.constant 0 : index
    %0 = vector.load %arg0[%c0, %c0_0] : memref<32x32xbf16, #tpu.memory_space<vmem>>, vector<32x32xbf16>
    %c0_1 = arith.constant 0 : index
    %c0_2 = arith.constant 0 : index
    %1 = vector.load %arg1[%c0_1, %c0_2] : memref<32x128xbf16, #tpu.memory_space<vmem>>, vector<32x128xbf16>
    %cst = arith.constant dense<0.000000e+00> : vector<32x128xf32>
    %2 = tpu.matmul %0, %1, %cst {dimension_numbers = #tpu.dot_dimension_numbers<[1], [0], [0], [1], [0, 0, 1, 1], [], []>} : vector<32x32xbf16>, vector<32x128xbf16>, vector<32x128xf32> -> vector<32x128xf32>
    %3 = arith.truncf %2 : vector<32x128xf32> to vector<32x128xbf16>
    %c0_3 = arith.constant 0 : index
    %c0_4 = arith.constant 0 : index
    %4 = vector.load %arg7[%c0_3, %c0_4] : memref<32x256xbf16, #tpu.memory_space<vmem>>, vector<32x128xbf16>
    tpu.vector_store %arg7[%c0_3, %c0_4], %3 {strides = array<i32>} : memref<32x256xbf16, #tpu.memory_space<vmem>>, vector<32x128xbf16>,
    %c0_5 = arith.constant 0 : index
    %c128 = arith.constant 128 : index
    %5 = vector.load %arg7[%c0_5, %c128] : memref<32x256xbf16, #tpu.memory_space<vmem>>, vector<32x128xbf16>
    tpu.vector_store %arg7[%c0_5, %c128], %1 {strides = array<i32>} : memref<32x256xbf16, #tpu.memory_space<vmem>>, vector<32x128xbf16>,
    %c0_6 = arith.constant 0 : index
    %c0_7 = arith.constant 0 : index
    %6 = vector.load %arg7[%c0_6, %c0_7] : memref<32x256xbf16, #tpu.memory_space<vmem>>, vector<32x256xbf16>
    %c0_8 = arith.constant 0 : index
    %c0_9 = arith.constant 0 : index
    %7 = vector.load %arg2[%c0_8, %c0_9] : memref<256x128xbf16, #tpu.memory_space<vmem>>, vector<256x128xbf16>
    %cst_10 = arith.constant dense<0.000000e+00> : vector<32x128xf32>
    %8 = tpu.matmul %6, %7, %cst_10 {dimension_numbers = #tpu.dot_dimension_numbers<[1], [0], [0], [1], [0, 0, 1, 1], [], []>} : vector<32x256xbf16>, vector<256x128xbf16>, vector<32x128xf32> -> vector<32x128xf32>
    %c0_11 = arith.constant 0 : index
    %c0_12 = arith.constant 0 : index
    %9 = vector.load %arg3[%c0_11, %c0_12] : memref<1x128xf32, #tpu.memory_space<vmem>>, vector<1x128xf32>
    %10 = vector.broadcast %9 : vector<1x128xf32> to vector<32x128xf32>
    %11 = arith.addf %8, %10 : vector<32x128xf32>
    %cst_13 = arith.constant 0.000000e+00 : f32
    %12 = vector.broadcast %cst_13 : f32 to vector<32x128xf32>
    %13 = arith.maximumf %11, %12 : vector<32x128xf32>
    %14 = arith.truncf %13 : vector<32x128xf32> to vector<32x128xbf16>
    %cst_14 = arith.constant dense<0.000000e+00> : vector<32x128xf32>
    %15 = tpu.matmul %0, %14, %cst_14 {dimension_numbers = #tpu.dot_dimension_numbers<[1], [0], [0], [1], [0, 0, 1, 1], [], []>} : vector<32x32xbf16>, vector<32x128xbf16>, vector<32x128xf32> -> vector<32x128xf32>
    %16 = arith.truncf %15 : vector<32x128xf32> to vector<32x128xbf16>
    %c0_15 = arith.constant 0 : index
    %c0_16 = arith.constant 0 : index
    %17 = vector.load %arg7[%c0_15, %c0_16] : memref<32x256xbf16, #tpu.memory_space<vmem>>, vector<32x128xbf16>
    tpu.vector_store %arg7[%c0_15, %c0_16], %16 {strides = array<i32>} : memref<32x256xbf16, #tpu.memory_space<vmem>>, vector<32x128xbf16>,
    %c0_17 = arith.constant 0 : index
    %c128_18 = arith.constant 128 : index
    %18 = vector.load %arg7[%c0_17, %c128_18] : memref<32x256xbf16, #tpu.memory_space<vmem>>, vector<32x128xbf16>
    tpu.vector_store %arg7[%c0_17, %c128_18], %14 {strides = array<i32>} : memref<32x256xbf16, #tpu.memory_space<vmem>>, vector<32x128xbf16>,
    %c0_19 = arith.constant 0 : index
    %c0_20 = arith.constant 0 : index
    %19 = vector.load %arg7[%c0_19, %c0_20] : memref<32x256xbf16, #tpu.memory_space<vmem>>, vector<32x256xbf16>
    %c0_21 = arith.constant 0 : index
    %c0_22 = arith.constant 0 : index
    %20 = vector.load %arg4[%c0_21, %c0_22] : memref<256x128xbf16, #tpu.memory_space<vmem>>, vector<256x128xbf16>
    %cst_23 = arith.constant dense<0.000000e+00> : vector<32x128xf32>
    %21 = tpu.matmul %19, %20, %cst_23 {dimension_numbers = #tpu.dot_dimension_numbers<[1], [0], [0], [1], [0, 0, 1, 1], [], []>} : vector<32x256xbf16>, vector<256x128xbf16>, vector<32x128xf32> -> vector<32x128xf32>
    %c0_24 = arith.constant 0 : index
    %c0_25 = arith.constant 0 : index
    %22 = vector.load %arg5[%c0_24, %c0_25] : memref<1x128xf32, #tpu.memory_space<vmem>>, vector<1x128xf32>
    %23 = vector.broadcast %22 : vector<1x128xf32> to vector<32x128xf32>
    %24 = arith.addf %21, %23 : vector<32x128xf32>
    %c0_26 = arith.constant 0 : index
    %c0_27 = arith.constant 0 : index
    %25 = vector.load %arg6[%c0_26, %c0_27] : memref<32x128xf32, #tpu.memory_space<vmem>>, vector<32x128xf32>
    tpu.vector_store %arg6[%c0_26, %c0_27], %24 {strides = array<i32>} : memref<32x128xf32, #tpu.memory_space<vmem>>, vector<32x128xf32>,
    return
  }
}

</mosaic_0001>

<llo_original>
// kernel: graphsage_forward.1
$region0: #{graphsage_forward.1}
  #allocation0 [shape = 'u32[]', space=smem, size = 0x4, offset = 0x4, fixed_abs, tag = 'smem constant byte address 0x4 - core index']
  #allocation1 [shape = 'u32[144,128]{1,0:T(1,128)}', space=vmem, size = 0x12000, scoped, tag = 'internal scratch']
  #allocation2 [shape = 'bf16[32,256]{1,0:T(16,128)(2,1)}', space=vmem, size = 0x4000, scoped, tag = 'scratch operand']
  %s0 = inlined_call_operand.vmem [shape: bf16[32,32], index: 0, kind: input, shape index: {}]
  %s1 = inlined_call_operand.vmem [shape: bf16[32,128], index: 1, kind: input, shape index: {}]
  %s2 = inlined_call_operand.vmem [shape: bf16[256,128], index: 2, kind: input, shape index: {}]
  %s3 = inlined_call_operand.vmem [shape: f32[1,128], index: 3, kind: input, shape index: {}]
  %s4 = inlined_call_operand.vmem [shape: bf16[256,128], index: 4, kind: input, shape index: {}]
  %s5 = inlined_call_operand.vmem [shape: f32[1,128], index: 5, kind: input, shape index: {}]
  %s6 = inlined_call_operand.vmem [shape: f32[32,128], index: 6, kind: output, shape index: {}]
  %s7 = sld [smem:[#allocation0]]
  $region34: #{graphsage_forward.1} parent=0
    _
  %s9 = ssub.s32 1, %s7
  %s10 = scalar_select 0, %s9, %s7
  // Predicated region
  $region2: #{graphsage_forward.1} parent=0 // pred_check
    _
  $region3: #{graphsage_forward.1} parent=0 // pred_check_branch
    %12 = sbr.rel (0) target = $region5
  $region4: #{graphsage_forward.1} parent=0 // pred_region
    _
  $region5: #{graphsage_forward.1} parent=0 // pred_fallthru
    _
  // Predicated region
  $region6: #{graphsage_forward.1} parent=0 // pred_check
    _
  $region7: #{graphsage_forward.1} parent=0 // pred_check_branch
    %14 = sbr.rel (0) target = $region9
  $region8: #{graphsage_forward.1} parent=0 // pred_region
    _
  $region9: #{graphsage_forward.1} parent=0 // pred_fallthru
    _
  // Predicated region
  $region10: #{graphsage_forward.1} parent=0 // pred_check
    _
  $region11: #{graphsage_forward.1} parent=0 // pred_check_branch
    %16 = sbr.rel (0) target = $region13
  $region12: #{graphsage_forward.1} parent=0 // pred_region
    _
  $region13: #{graphsage_forward.1} parent=0 // pred_fallthru
    _
  // Predicated region
  $region14: #{graphsage_forward.1} parent=0 // pred_check
    _
  $region15: #{graphsage_forward.1} parent=0 // pred_check_branch
    %18 = sbr.rel (0) target = $region17
  $region16: #{graphsage_forward.1} parent=0 // pred_region
    _
  $region17: #{graphsage_forward.1} parent=0 // pred_fallthru
    _
  // Predicated region
  $region18: #{graphsage_forward.1} parent=0 // pred_check
    _
  $region19: #{graphsage_forward.1} parent=0 // pred_check_branch
    %20 = sbr.rel (0) target = $region21
  $region20: #{graphsage_forward.1} parent=0 // pred_region
    _
  $region21: #{graphsage_forward.1} parent=0 // pred_fallthru
    _
  // Predicated region
  $region22: #{graphsage_forward.1} parent=0 // pred_check
    _
  $region23: #{graphsage_forward.1} parent=0 // pred_check_branch
    %22 = sbr.rel (0) target = $region25
  $region24: #{graphsage_forward.1} parent=0 // pred_region
    _
  $region25: #{graphsage_forward.1} parent=0 // pred_fallthru
    _
  %v24 = vld [vmem:[%s0] sm:$0xf]
  %v25 = vld [vmem:[%s0 + $0x4] sm:$0xf]
  %v26 = vld [vmem:[%s0 + $0x8] sm:$0xf]
  %v27 = vld [vmem:[%s0 + $0xc] sm:$0xf]
  %v28 = vld [vmem:[%s1] sm:$0xf]
  %v29 = vld [vmem:[%s1 + $0x4] sm:$0xf]
  %v30 = vld [vmem:[%s1 + $0x8] sm:$0xf]
  %v31 = vld [vmem:[%s1 + $0xc] sm:$0xf]
  %v36 = vunpack.c.l.b16 %v24
  %v37 = vunpack.c.l.b16 %v25
  %v38 = vunpack.c.l.b16 %v26
  %v39 = vunpack.c.l.b16 %v27
  %v40 = vpack.c.b16 %v37, %v36
  %v41 = vpack.c.b16 %v39, %v38
  %v46 = vunpack.c.l.b16 %v28
  %v47 = vunpack.c.l.b16 %v29
  %v48 = vunpack.c.l.b16 %v30
  %v49 = vunpack.c.l.b16 %v31
  %v50 = vpack.c.b16 %v47, %v46
  %v51 = vpack.c.b16 %v49, %v48
  %vm54 = vcmask 261120
  %v56 = vsel %vm54, %v40, 0
  %v59 = vsel %vm54, %v41, 0
  %61 = vmatprep.subr.bf16.mxu0 0
  %62 = vmatpush1.bf16.msra.mxu0 %v50
  %63 = vmatprep.subr.bf16.mxu0 0
  %64 = vmatpush1.bf16.msra.mxu0 %v51
  %65 = vmatprep.subr.bf16.mxu0 0
  %66 = vmatpush1.bf16.msra.mxu0 0
  %67 = vmatprep.subr.bf16.mxu0 0
  %68 = vmatpush1.bf16.msra.mxu0 0
  %69 = vmatprep.subr.bf16.mxu0 0
  %70 = vmatpush1.bf16.msra.mxu0 0
  %71 = vmatprep.subr.bf16.mxu0 0
  %72 = vmatpush1.bf16.msra.mxu0 0
  %73 = vmatprep.subr.bf16.mxu0 0
  %74 = vmatpush1.bf16.msra.mxu0 0
  %75 = vmatprep.subr.bf16.mxu0 0
  %76 = vmatpush1.bf16.msra.mxu0 0
  %77 = vmatprep.subr.bf16.mxu0 0
  %78 = vmatpush1.bf16.msra.mxu0 0
  %79 = vmatprep.subr.bf16.mxu0 0
  %80 = vmatpush1.bf16.msra.mxu0 0
  %81 = vmatprep.subr.bf16.mxu0 0
  %82 = vmatpush1.bf16.msra.mxu0 0
  %83 = vmatprep.subr.bf16.mxu0 0
  %84 = vmatpush1.bf16.msra.mxu0 0
  %85 = vmatprep.subr.bf16.mxu0 0
  %86 = vmatpush1.bf16.msra.mxu0 0
  %87 = vmatprep.subr.bf16.mxu0 0
  %88 = vmatpush1.bf16.msra.mxu0 0
  %89 = vmatprep.subr.bf16.mxu0 0
  %90 = vmatpush1.bf16.msra.mxu0 0
  %91 = vmatprep.subr.bf16.mxu0 0
  %92 = vmatpush1.bf16.msra.mxu0 0
  %93 = vmatprep.mubr.bf16.mxu0 0
  %94 = vmatmul.mubr.bf16.gmra.mrb[0].mxu0 %v56
  %v95 = vpop.f32.mrb[0].mxu0
  %v96 = vadd.f32 0.0, %v95
  %v97 = vpop.f32.mrb[0].mxu0
  %v98 = vpop.f32.mrb[0].mxu0
  %v99 = vadd.f32 0.0, %v98
  %v100 = vpop.f32.mrb[0].mxu0
  %101 = vmatprep.mubr.bf16.mxu0 0
  %102 = vmatmul.mubr.bf16.gmra.mrb[0].mxu0 %v59
  %v103 = vpop.f32.mrb[0].mxu0
  %v104 = vadd.f32 0.0, %v103
  %v105 = vpop.f32.mrb[0].mxu0
  %v106 = vpop.f32.mrb[0].mxu0
  %v107 = vadd.f32 0.0, %v106
  %v108 = vpop.f32.mrb[0].mxu0
  %109 = vdwg.mxu0
  %v110 = vpack.c.bf16 %v99, %v96
  %v111 = vpack.c.bf16 %v107, %v104
  %112 = vst [vmem:[#allocation2] sm:$0xff] %v110
  %113 = vst [vmem:[#allocation2 + $0x10] sm:$0xff] %v111
  %114 = vst [vmem:[#allocation2 + $0x8] sm:$0xff] %v50
  %115 = vst [vmem:[#allocation2 + $0x18] sm:$0xff] %v51
  %v116 = vld [vmem:[#allocation2] sm:$0xff]
  %v117 = vld [vmem:[#allocation2 + $0x8] sm:$0xff]
  %v118 = vld [vmem:[#allocation2 + $0x10] sm:$0xff]
  %v119 = vld [vmem:[#allocation2 + $0x18] sm:$0xff]
  %v120 = vld [vmem:[%s2] sm:$0xf]
  %v121 = vld [vmem:[%s2 + $0x4] sm:$0xf]
  %v122 = vld [vmem:[%s2 + $0x8] sm:$0xf]
  %v123 = vld [vmem:[%s2 + $0xc] sm:$0xf]
  %v124 = vld [vmem:[%s2 + $0x10] sm:$0xf]
  %v125 = vld [vmem:[%s2 + $0x14] sm:$0xf]
  %v126 = vld [vmem:[%s2 + $0x18] sm:$0xf]
  %v127 = vld [vmem:[%s2 + $0x1c] sm:$0xf]
  %v128 = vld [vmem:[%s2 + $0x20] sm:$0xf]
  %v129 = vld [vmem:[%s2 + $0x24] sm:$0xf]
  %v130 = vld [vmem:[%s2 + $0x28] sm:$0xf]
  %v131 = vld [vmem:[%s2 + $0x2c] sm:$0xf]
  %v132 = vld [vmem:[%s2 + $0x30] sm:$0xf]
  %v133 = vld [vmem:[%s2 + $0x34] sm:$0xf]
  %v134 = vld [vmem:[%s2 + $0x38] sm:$0xf]
  %v135 = vld [vmem:[%s2 + $0x3c] sm:$0xf]
  %v136 = vld [vmem:[%s2 + $0x40] sm:$0xf]
  %v137 = vld [vmem:[%s2 + $0x44] sm:$0xf]
  %v138 = vld [vmem:[%s2 + $0x48] sm:$0xf]
  %v139 = vld [vmem:[%s2 + $0x4c] sm:$0xf]
  %v140 = vld [vmem:[%s2 + $0x50] sm:$0xf]
  %v141 = vld [vmem:[%s2 + $0x54] sm:$0xf]
  %v142 = vld [vmem:[%s2 + $0x58] sm:$0xf]
  %v143 = vld [vmem:[%s2 + $0x5c] sm:$0xf]
  %v144 = vld [vmem:[%s2 + $0x60] sm:$0xf]
  %v145 = vld [vmem:[%s2 + $0x64] sm:$0xf]
  %v146 = vld [vmem:[%s2 + $0x68] sm:$0xf]
  %v147 = vld [vmem:[%s2 + $0x6c] sm:$0xf]
  %v148 = vld [vmem:[%s2 + $0x70] sm:$0xf]
  %v149 = vld [vmem:[%s2 + $0x74] sm:$0xf]
  %v150 = vld [vmem:[%s2 + $0x78] sm:$0xf]
  %v151 = vld [vmem:[%s2 + $0x7c] sm:$0xf]
  %v152 = vld [vmem:[%s3] sm:$0x1]
  %v154 = vlaneseq
  %v155 = vshrl.u32 %v154, 7
  %v156 = vsub.s32 0, %v155
  %v157 = vrot.slane %v152, %v156
  %v191 = vunpack.c.l.b16 %v120
  %v192 = vunpack.c.l.b16 %v121
  %v193 = vunpack.c.l.b16 %v122
  %v194 = vunpack.c.l.b16 %v123
  %v195 = vunpack.c.l.b16 %v124
  %v196 = vunpack.c.l.b16 %v125
  %v197 = vunpack.c.l.b16 %v126
  %v198 = vunpack.c.l.b16 %v127
  %v199 = vunpack.c.l.b16 %v128
  %v200 = vunpack.c.l.b16 %v129
  %v201 = vunpack.c.l.b16 %v130
  %v202 = vunpack.c.l.b16 %v131
  %v203 = vunpack.c.l.b16 %v132
  %v204 = vunpack.c.l.b16 %v133
  %v205 = vunpack.c.l.b16 %v134
  %v206 = vunpack.c.l.b16 %v135
  %v207 = vunpack.c.l.b16 %v136
  %v208 = vunpack.c.l.b16 %v137
  %v209 = vunpack.c.l.b16 %v138
  %v210 = vunpack.c.l.b16 %v139
  %v211 = vunpack.c.l.b16 %v140
  %v212 = vunpack.c.l.b16 %v141
  %v213 = vunpack.c.l.b16 %v142
  %v214 = vunpack.c.l.b16 %v143
  %v215 = vunpack.c.l.b16 %v144
  %v216 = vunpack.c.l.b16 %v145
  %v217 = vunpack.c.l.b16 %v146
  %v218 = vunpack.c.l.b16 %v147
  %v219 = vunpack.c.l.b16 %v148
  %v220 = vunpack.c.l.b16 %v149
  %v221 = vunpack.c.l.b16 %v150
  %v222 = vunpack.c.l.b16 %v151
  %v223 = vpack.c.b16 %v192, %v191
  %v224 = vpack.c.b16 %v194, %v193
  %v225 = vpack.c.b16 %v196, %v195
  %v226 = vpack.c.b16 %v198, %v197
  %v227 = vpack.c.b16 %v200, %v199
  %v228 = vpack.c.b16 %v202, %v201
  %v229 = vpack.c.b16 %v204, %v203
  %v230 = vpack.c.b16 %v206, %v205
  %v231 = vpack.c.b16 %v208, %v207
  %v232 = vpack.c.b16 %v210, %v209
  %v233 = vpack.c.b16 %v212, %v211
  %v234 = vpack.c.b16 %v214, %v213
  %v235 = vpack.c.b16 %v216, %v215
  %v236 = vpack.c.b16 %v218, %v217
  %v237 = vpack.c.b16 %v220, %v219
  %v238 = vpack.c.b16 %v222, %v221
  %255 = vmatprep.subr.bf16.mxu0 0
  %256 = vmatpush1.bf16.msra.mxu0 %v223
  %257 = vmatprep.subr.bf16.mxu0 0
  %258 = vmatpush1.bf16.msra.mxu0 %v224
  %259 = vmatprep.subr.bf16.mxu0 0
  %260 = vmatpush1.bf16.msra.mxu0 %v225
  %261 = vmatprep.subr.bf16.mxu0 0
  %262 = vmatpush1.bf16.msra.mxu0 %v226
  %263 = vmatprep.subr.bf16.mxu0 0
  %264 = vmatpush1.bf16.msra.mxu0 %v227
  %265 = vmatprep.subr.bf16.mxu0 0
  %266 = vmatpush1.bf16.msra.mxu0 %v228
  %267 = vmatprep.subr.bf16.mxu0 0
  %268 = vmatpush1.bf16.msra.mxu0 %v229
  %269 = vmatprep.subr.bf16.mxu0 0
  %270 = vmatpush1.bf16.msra.mxu0 %v230
  %271 = vmatprep.subr.bf16.mxu0 0
  %272 = vmatpush1.bf16.msra.mxu0 %v231
  %273 = vmatprep.subr.bf16.mxu0 0
  %274 = vmatpush1.bf16.msra.mxu0 %v232
  %275 = vmatprep.subr.bf16.mxu0 0
  %276 = vmatpush1.bf16.msra.mxu0 %v233
  %277 = vmatprep.subr.bf16.mxu0 0
  %278 = vmatpush1.bf16.msra.mxu0 %v234
  %279 = vmatprep.subr.bf16.mxu0 0
  %280 = vmatpush1.bf16.msra.mxu0 %v235
  %281 = vmatprep.subr.bf16.mxu0 0
  %282 = vmatpush1.bf16.msra.mxu0 %v236
  %283 = vmatprep.subr.bf16.mxu0 0
  %284 = vmatpush1.bf16.msra.mxu0 %v237
  %285 = vmatprep.subr.bf16.mxu0 0
  %286 = vmatpush1.bf16.msra.mxu0 %v238
  %287 = vmatprep.mubr.bf16.mxu0 %v117
  %288 = vmatmul.mubr.bf16.gmra.mrb[0].mxu0 %v116
  %v289 = vpop.f32.mrb[0].mxu0
  %v290 = vadd.f32 %v157, %v289
  %v291 = vpop.f32.mrb[0].mxu0
  %v292 = vpop.f32.mrb[0].mxu0
  %v293 = vadd.f32 %v157, %v292
  %v294 = vpop.f32.mrb[0].mxu0
  %295 = vmatprep.mubr.bf16.mxu0 %v119
  %296 = vmatmul.mubr.bf16.gmra.mrb[0].mxu0 %v118
  %v297 = vpop.f32.mrb[0].mxu0
  %v298 = vadd.f32 %v157, %v297
  %v299 = vpop.f32.mrb[0].mxu0
  %v300 = vpop.f32.mrb[0].mxu0
  %v301 = vadd.f32 %v157, %v300
  %v302 = vpop.f32.mrb[0].mxu0
  %303 = vdwg.mxu0
  %v304 = vmax.f32 %v290, 0.0
  %v305 = vmax.f32 %v293, 0.0
  %v306 = vmax.f32 %v298, 0.0
  %v307 = vmax.f32 %v301, 0.0
  %v308 = vpack.c.bf16 %v305, %v304
  %v309 = vpack.c.bf16 %v307, %v306
  %310 = vmatprep.subr.bf16.mxu0 0
  %311 = vmatpush1.bf16.msra.mxu0 %v308
  %312 = vmatprep.subr.bf16.mxu0 0
  %313 = vmatpush1.bf16.msra.mxu0 %v309
  %314 = vmatprep.subr.bf16.mxu0 0
  %315 = vmatpush1.bf16.msra.mxu0 0
  %316 = vmatprep.subr.bf16.mxu0 0
  %317 = vmatpush1.bf16.msra.mxu0 0
  %318 = vmatprep.subr.bf16.mxu0 0
  %319 = vmatpush1.bf16.msra.mxu0 0
  %320 = vmatprep.subr.bf16.mxu0 0
  %321 = vmatpush1.bf16.msra.mxu0 0
  %322 = vmatprep.subr.bf16.mxu0 0
  %323 = vmatpush1.bf16.msra.mxu0 0
  %324 = vmatprep.subr.bf16.mxu0 0
  %325 = vmatpush1.bf16.msra.mxu0 0
  %326 = vmatprep.subr.bf16.mxu0 0
  %327 = vmatpush1.bf16.msra.mxu0 0
  %328 = vmatprep.subr.bf16.mxu0 0
  %329 = vmatpush1.bf16.msra.mxu0 0
  %330 = vmatprep.subr.bf16.mxu0 0
  %331 = vmatpush1.bf16.msra.mxu0 0
  %332 = vmatprep.subr.bf16.mxu0 0
  %333 = vmatpush1.bf16.msra.mxu0 0
  %334 = vmatprep.subr.bf16.mxu0 0
  %335 = vmatpush1.bf16.msra.mxu0 0
  %336 = vmatprep.subr.bf16.mxu0 0
  %337 = vmatpush1.bf16.msra.mxu0 0
  %338 = vmatprep.subr.bf16.mxu0 0
  %339 = vmatpush1.bf16.msra.mxu0 0
  %340 = vmatprep.subr.bf16.mxu0 0
  %341 = vmatpush1.bf16.msra.mxu0 0
  %342 = vmatprep.mubr.bf16.mxu0 0
  %343 = vmatmul.mubr.bf16.gmra.mrb[0].mxu0 %v56
  %v344 = vpop.f32.mrb[0].mxu0
  %v345 = vadd.f32 0.0, %v344
  %v346 = vpop.f32.mrb[0].mxu0
  %v347 = vpop.f32.mrb[0].mxu0
  %v348 = vadd.f32 0.0, %v347
  %v349 = vpop.f32.mrb[0].mxu0
  %350 = vmatprep.mubr.bf16.mxu0 0
  %351 = vmatmul.mubr.bf16.gmra.mrb[0].mxu0 %v59
  %v352 = vpop.f32.mrb[0].mxu0
  %v353 = vadd.f32 0.0, %v352
  %v354 = vpop.f32.mrb[0].mxu0
  %v355 = vpop.f32.mrb[0].mxu0
  %v356 = vadd.f32 0.0, %v355
  %v357 = vpop.f32.mrb[0].mxu0
  %358 = vdwg.mxu0
  %v359 = vpack.c.bf16 %v348, %v345
  %v360 = vpack.c.bf16 %v356, %v353
  %361 = vst [vmem:[#allocation2] sm:$0xff] %v359
  %362 = vst [vmem:[#allocation2 + $0x10] sm:$0xff] %v360
  %363 = vst [vmem:[#allocation2 + $0x8] sm:$0xff] %v308
  %364 = vst [vmem:[#allocation2 + $0x18] sm:$0xff] %v309
  %v365 = vld [vmem:[#allocation2] sm:$0xff]
  %v366 = vld [vmem:[#allocation2 + $0x8] sm:$0xff]
  %v367 = vld [vmem:[#allocation2 + $0x10] sm:$0xff]
  %v368 = vld [vmem:[#allocation2 + $0x18] sm:$0xff]
  %v369 = vld [vmem:[%s4] sm:$0xf]
  %v370 = vld [vmem:[%s4 + $0x4] sm:$0xf]
  %v371 = vld [vmem:[%s4 + $0x8] sm:$0xf]
  %v372 = vld [vmem:[%s4 + $0xc] sm:$0xf]
  %v373 = vld [vmem:[%s4 + $0x10] sm:$0xf]
  %v374 = vld [vmem:[%s4 + $0x14] sm:$0xf]
  %v375 = vld [vmem:[%s4 + $0x18] sm:$0xf]
  %v376 = vld [vmem:[%s4 + $0x1c] sm:$0xf]
  %v377 = vld [vmem:[%s4 + $0x20] sm:$0xf]
  %v378 = vld [vmem:[%s4 + $0x24] sm:$0xf]
  %v379 = vld [vmem:[%s4 + $0x28] sm:$0xf]
  %v380 = vld [vmem:[%s4 + $0x2c] sm:$0xf]
  %v381 = vld [vmem:[%s4 + $0x30] sm:$0xf]
  %v382 = vld [vmem:[%s4 + $0x34] sm:$0xf]
  %v383 = vld [vmem:[%s4 + $0x38] sm:$0xf]
  %v384 = vld [vmem:[%s4 + $0x3c] sm:$0xf]
  %v385 = vld [vmem:[%s4 + $0x40] sm:$0xf]
  %v386 = vld [vmem:[%s4 + $0x44] sm:$0xf]
  %v387 = vld [vmem:[%s4 + $0x48] sm:$0xf]
  %v388 = vld [vmem:[%s4 + $0x4c] sm:$0xf]
  %v389 = vld [vmem:[%s4 + $0x50] sm:$0xf]
  %v390 = vld [vmem:[%s4 + $0x54] sm:$0xf]
  %v391 = vld [vmem:[%s4 + $0x58] sm:$0xf]
  %v392 = vld [vmem:[%s4 + $0x5c] sm:$0xf]
  %v393 = vld [vmem:[%s4 + $0x60] sm:$0xf]
  %v394 = vld [vmem:[%s4 + $0x64] sm:$0xf]
  %v395 = vld [vmem:[%s4 + $0x68] sm:$0xf]
  %v396 = vld [vmem:[%s4 + $0x6c] sm:$0xf]
  %v397 = vld [vmem:[%s4 + $0x70] sm:$0xf]
  %v398 = vld [vmem:[%s4 + $0x74] sm:$0xf]
  %v399 = vld [vmem:[%s4 + $0x78] sm:$0xf]
  %v400 = vld [vmem:[%s4 + $0x7c] sm:$0xf]
  %v401 = vld [vmem:[%s5] sm:$0x1]
  %v403 = vlaneseq
  %v404 = vshrl.u32 %v403, 7
  %v405 = vsub.s32 0, %v404
  %v406 = vrot.slane %v401, %v405
  %v440 = vunpack.c.l.b16 %v369
  %v441 = vunpack.c.l.b16 %v370
  %v442 = vunpack.c.l.b16 %v371
  %v443 = vunpack.c.l.b16 %v372
  %v444 = vunpack.c.l.b16 %v373
  %v445 = vunpack.c.l.b16 %v374
  %v446 = vunpack.c.l.b16 %v375
  %v447 = vunpack.c.l.b16 %v376
  %v448 = vunpack.c.l.b16 %v377
  %v449 = vunpack.c.l.b16 %v378
  %v450 = vunpack.c.l.b16 %v379
  %v451 = vunpack.c.l.b16 %v380
  %v452 = vunpack.c.l.b16 %v381
  %v453 = vunpack.c.l.b16 %v382
  %v454 = vunpack.c.l.b16 %v383
  %v455 = vunpack.c.l.b16 %v384
  %v456 = vunpack.c.l.b16 %v385
  %v457 = vunpack.c.l.b16 %v386
  %v458 = vunpack.c.l.b16 %v387
  %v459 = vunpack.c.l.b16 %v388
  %v460 = vunpack.c.l.b16 %v389
  %v461 = vunpack.c.l.b16 %v390
  %v462 = vunpack.c.l.b16 %v391
  %v463 = vunpack.c.l.b16 %v392
  %v464 = vunpack.c.l.b16 %v393
  %v465 = vunpack.c.l.b16 %v394
  %v466 = vunpack.c.l.b16 %v395
  %v467 = vunpack.c.l.b16 %v396
  %v468 = vunpack.c.l.b16 %v397
  %v469 = vunpack.c.l.b16 %v398
  %v470 = vunpack.c.l.b16 %v399
  %v471 = vunpack.c.l.b16 %v400
  %v472 = vpack.c.b16 %v441, %v440
  %v473 = vpack.c.b16 %v443, %v442
  %v474 = vpack.c.b16 %v445, %v444
  %v475 = vpack.c.b16 %v447, %v446
  %v476 = vpack.c.b16 %v449, %v448
  %v477 = vpack.c.b16 %v451, %v450
  %v478 = vpack.c.b16 %v453, %v452
  %v479 = vpack.c.b16 %v455, %v454
  %v480 = vpack.c.b16 %v457, %v456
  %v481 = vpack.c.b16 %v459, %v458
  %v482 = vpack.c.b16 %v461, %v460
  %v483 = vpack.c.b16 %v463, %v462
  %v484 = vpack.c.b16 %v465, %v464
  %v485 = vpack.c.b16 %v467, %v466
  %v486 = vpack.c.b16 %v469, %v468
  %v487 = vpack.c.b16 %v471, %v470
  %504 = vmatprep.subr.bf16.mxu0 0
  %505 = vmatpush1.bf16.msra.mxu0 %v472
  %506 = vmatprep.subr.bf16.mxu0 0
  %507 = vmatpush1.bf16.msra.mxu0 %v473
  %508 = vmatprep.subr.bf16.mxu0 0
  %509 = vmatpush1.bf16.msra.mxu0 %v474
  %510 = vmatprep.subr.bf16.mxu0 0
  %511 = vmatpush1.bf16.msra.mxu0 %v475
  %512 = vmatprep.subr.bf16.mxu0 0
  %513 = vmatpush1.bf16.msra.mxu0 %v476
  %514 = vmatprep.subr.bf16.mxu0 0
  %515 = vmatpush1.bf16.msra.mxu0 %v477
  %516 = vmatprep.subr.bf16.mxu0 0
  %517 = vmatpush1.bf16.msra.mxu0 %v478
  %518 = vmatprep.subr.bf16.mxu0 0
  %519 = vmatpush1.bf16.msra.mxu0 %v479
  %520 = vmatprep.subr.bf16.mxu0 0
  %521 = vmatpush1.bf16.msra.mxu0 %v480
  %522 = vmatprep.subr.bf16.mxu0 0
  %523 = vmatpush1.bf16.msra.mxu0 %v481
  %524 = vmatprep.subr.bf16.mxu0 0
  %525 = vmatpush1.bf16.msra.mxu0 %v482
  %526 = vmatprep.subr.bf16.mxu0 0
  %527 = vmatpush1.bf16.msra.mxu0 %v483
  %528 = vmatprep.subr.bf16.mxu0 0
  %529 = vmatpush1.bf16.msra.mxu0 %v484
  %530 = vmatprep.subr.bf16.mxu0 0
  %531 = vmatpush1.bf16.msra.mxu0 %v485
  %532 = vmatprep.subr.bf16.mxu0 0
  %533 = vmatpush1.bf16.msra.mxu0 %v486
  %534 = vmatprep.subr.bf16.mxu0 0
  %535 = vmatpush1.bf16.msra.mxu0 %v487
  %536 = vmatprep.mubr.bf16.mxu0 %v366
  %537 = vmatmul.mubr.bf16.gmra.mrb[0].mxu0 %v365
  %v538 = vpop.f32.mrb[0].mxu0
  %v539 = vadd.f32 %v406, %v538
  %v540 = vpop.f32.mrb[0].mxu0
  %v541 = vpop.f32.mrb[0].mxu0
  %v542 = vadd.f32 %v406, %v541
  %v543 = vpop.f32.mrb[0].mxu0
  %544 = vmatprep.mubr.bf16.mxu0 %v368
  %545 = vmatmul.mubr.bf16.gmra.mrb[0].mxu0 %v367
  %v546 = vpop.f32.mrb[0].mxu0
  %v547 = vadd.f32 %v406, %v546
  %v548 = vpop.f32.mrb[0].mxu0
  %v549 = vpop.f32.mrb[0].mxu0
  %v550 = vadd.f32 %v406, %v549
  %v551 = vpop.f32.mrb[0].mxu0
  %552 = vdwg.mxu0
  %553 = vst [vmem:[%s6] sm:$0xff] %v539
  %554 = vst [vmem:[%s6 + $0x8] sm:$0xff] %v542
  %555 = vst [vmem:[%s6 + $0x10] sm:$0xff] %v547
  %556 = vst [vmem:[%s6 + $0x18] sm:$0xff] %v550
  // Predicated region
  $region26: #{graphsage_forward.1} parent=0 // pred_check
    _
  $region27: #{graphsage_forward.1} parent=0 // pred_check_branch
    %558 = sbr.rel (0) target = $region29
  $region28: #{graphsage_forward.1} parent=0 // pred_region
    _
  $region29: #{graphsage_forward.1} parent=0 // pred_fallthru
    _
  // Predicated region
  $region30: #{graphsage_forward.1} parent=0 // pred_check
    _
  $region31: #{graphsage_forward.1} parent=0 // pred_check_branch
    %560 = sbr.rel (0) target = $region33
  $region32: #{graphsage_forward.1} parent=0 // pred_region
    _
  $region33: #{graphsage_forward.1} parent=0 // pred_fallthru
    _

</llo_original>
